<compile_context>
chip_gen: v5e
topology: v5e:2x2
jax: 0.10.0
libtpu: 0.0.40
codegen_flags: <defaults>
</compile_context>

<pallas_src>
import math
import functools

import jax
import jax.numpy as jnp
from jax.experimental import pallas as pl
from jax.experimental.pallas import tpu as pltpu


def _vmem_capacity_bytes() -> int:
    """Per-TensorCore VMEM capacity; conservative fallback if the query fails."""
    try:
        return int(pltpu.get_tpu_info().vmem_capacity_bytes)
    except Exception:
        return 64 * 1024 * 1024  # v7x per-TC VMEM (smallest of v5e/v6e/v7x)


def _proj3(x3, w, b):
    """(bt, s, k) @ (k, n) + (1, n) -> (bt, s, n), f32 accumulate on the MXU."""
    bt, s, k = x3.shape
    if s % 8 == 0:
        # (bt, s) merge is layout-free when s is sublane (8) aligned.
        y = jnp.dot(x3.reshape(bt * s, k), w, preferred_element_type=jnp.float32)
        return y.reshape(bt, s, -1) + b
    # s not sublane-aligned: per-batch 2-D dots avoid a materialized relayout.
    ys = [jnp.dot(x3[i], w, preferred_element_type=jnp.float32) + b
          for i in range(bt)]
    return jnp.stack(ys, axis=0)


def _attn_kernel(x_ref, wqkv_ref, bqkv_ref, wo_ref, bo_ref, o_ref):
    bt, s, d = x_ref.shape
    d8 = wo_ref.shape[0]
    seg = wqkv_ref.shape[1] // 3     # 128-lane-aligned segment per Q/K/V (>= d8)

    # f32 tile from HBM, cast to bf16 in-kernel (VPU is idle; halves no HBM bytes
    # twice the way a wrapper-side cast would).
    xb = x_ref[...].astype(jnp.bfloat16)

    # Fused Q/K/V projection: one MXU matmul, f32 accumulate, f32 bias add.
    qkv = _proj3(xb, wqkv_ref[...], bqkv_ref[...])          # (bt, s, 3*seg) f32

    # Lane-aligned slices (offsets are multiples of 128 when d8 < 128).
    q = qkv[..., 0 * seg: 0 * seg + d8]                     # (bt, s, d8) f32
    k = qkv[..., 1 * seg: 1 * seg + d8]
    v = qkv[..., 2 * seg: 2 * seg + d8]

    # Channel-attention scores without an explicit q transpose:
    #   scores[b, d, e] = sum_s q[b, s, d] * k[b, s, e]
    scale = 1.0 / math.sqrt(d8)
    scores = jnp.einsum("bsd,bse->bde", q, k,
                        preferred_element_type=jnp.float32) * scale

    # Exact f32 softmax over the last dim (tiny: B*D8^2 elements).
    m = jnp.max(scores, axis=-1, keepdims=True)
    e = jnp.exp(scores - m)
    p = e / jnp.sum(e, axis=-1, keepdims=True)               # (bt, d8, d8) f32

    # weighted_v[b,s,d] = sum_e attn[b,d,e] * v[b,s,e]   (no materialized transposes)
    wv = jnp.einsum("bse,bde->bsd", v, p,
                    preferred_element_type=jnp.float32)      # (bt, s, d8) f32

    # Output projection back to D.
    y = _proj3(wv.astype(jnp.bfloat16), wo_ref[...], bo_ref[...])   # (bt, s, D) f32
    o_ref[...] = y.astype(o_ref.dtype)


def attention_layer(x, params, *, block_b=None, out_dtype=jnp.bfloat16):
    """x: (B, S, D) float32.  params: dict of pre-transposed f32 weights/biases."""
    B, S, D = x.shape
    D8 = D // 8
    # Pad each of Q/K/V to a 128-lane segment inside the fused weight so the
    # kernel slices at lane-aligned offsets (no-op when D8 is already aligned).
    seg = (-(-D8 // 128)) * 128

    wq, wk, wv_ = params["wq"], params["wk"], params["wv"]
    bq, bk, bv_ = params["bq"], params["bk"], params["bv"]
    if seg == D8:
        wqkv = jnp.concatenate([wq, wk, wv_], axis=1)
        bqkv = jnp.concatenate([bq, bk, bv_], axis=1)
    else:
        wqkv = jnp.zeros((D, 3 * seg), jnp.float32)
        bqkv = jnp.zeros((1, 3 * seg), jnp.float32)
        for i, (w, b) in enumerate(((wq, bq), (wk, bk), (wv_, bv_))):
            wqkv = wqkv.at[:, i * seg: i * seg + D8].set(w)
            bqkv = bqkv.at[:, i * seg: i * seg + D8].set(b)
    # Weights in bf16 for the MXU (one-time DMA); biases stay f32.
    wqkv = wqkv.astype(jnp.bfloat16)
    bqkv = bqkv.astype(jnp.float32)
    wo = params["wo"].astype(jnp.bfloat16)
    bo = params["bo"].astype(jnp.float32)

    out_bytes = jnp.dtype(out_dtype).itemsize

    # --- VMEM-budgeted batch tile -------------------------------------------
    vmem_cap = _vmem_capacity_bytes()
    vmem_limit = max(32 * 1024 * 1024, (vmem_cap * 3) // 4)   # leave headroom

    # Static per-step footprint estimate (double-buffered I/O tiles, resident
    # weights, and the in-kernel intermediates).
    weight_bytes = 2 * (D * 3 * seg * 2 + 3 * seg * 4 + D8 * D * 2 + D * 4)
    per_b = S * D * (2 * 4 + 2 * out_bytes)        # x (f32) + out tiles, 2x buffered
    per_b += S * 3 * seg * (4 + 2)                 # qkv f32 accumulate + bf16 staging
    per_b += S * D8 * (4 + 4 + 2)                  # q/k/v views + weighted_v
    per_b += D8 * D8 * 4 * 3                       # scores / softmax temporaries
    cap_b = max(1, (vmem_limit - weight_bytes - (2 << 20)) // per_b)

    if block_b is None:
        # Cap at ceil(B/2) so the "parallel" grid has >= 2 steps whenever B >= 2
        # (lets v7x shard the grid across both TensorCores).
        block_b = max(1, min(cap_b, -(-B // 2)))
    block_b = int(max(1, min(block_b, B)))
    grid = (pl.cdiv(B, block_b),)

    # --- cost estimate (advisory) --------------------------------------------
    flops = 2 * B * S * (D * 3 * D8 + 2 * D8 * D8 + D8 * D)
    bytes_accessed = (B * S * D * 4                        # x read (f32)
                      + D * 3 * seg * 2 + 3 * seg * 4      # fused qkv weight/bias
                      + D8 * D * 2 + D * 4                 # out weight/bias
                      + B * S * D * out_bytes)             # output writeback
    cost = pl.CostEstimate(flops=flops, transcendentals=B * D8 * D8,
                           bytes_accessed=int(bytes_accessed))

    return pl.pallas_call(
        _attn_kernel,
        out_shape=jax.ShapeDtypeStruct((B, S, D), out_dtype),
        grid_spec=pltpu.PrefetchScalarGridSpec(
            num_scalar_prefetch=0,
            grid=grid,
            in_specs=[
                pl.BlockSpec((block_b, S, D), lambda b: (b, 0, 0)),   # x tile (f32)
                pl.BlockSpec((D, 3 * seg), lambda b: (0, 0)),         # fused qkv W
                pl.BlockSpec((1, 3 * seg), lambda b: (0, 0)),         # fused qkv b
                pl.BlockSpec((D8, D), lambda b: (0, 0)),              # out W
                pl.BlockSpec((1, D), lambda b: (0, 0)),               # out b
            ],
            out_specs=pl.BlockSpec((block_b, S, D), lambda b: (b, 0, 0)),
        ),
        compiler_params=pltpu.CompilerParams(
            dimension_semantics=("parallel",),
            vmem_limit_bytes=int(vmem_limit)),
        cost_estimate=cost,
    )(x, wqkv, bqkv, wo, bo)


def init_params(key, input_dim):
    """Deterministic init mimicking nn.Linear shapes (weights stored as (in, out))."""
    D, D8 = input_dim, input_dim // 8
    ks = jax.random.split(key, 8)

    def lin(kw, kb, fan_in, fan_out):
        bound = 1.0 / math.sqrt(fan_in)
        w = jax.random.uniform(kw, (fan_in, fan_out), jnp.float32, -bound, bound)
        b = jax.random.uniform(kb, (1, fan_out), jnp.float32, -bound, bound)
        return w, b

    wq, bq = lin(ks[0], ks[1], D, D8)
    wk, bk = lin(ks[2], ks[3], D, D8)
    wv, bv = lin(ks[4], ks[5], D, D8)
    wo, bo = lin(ks[6], ks[7], D8, D)
    return dict(wq=wq, bq=bq, wk=wk, bk=bk, wv=wv, bv=bv, wo=wo, bo=bo)


def reference(x, p):
    q = x @ p["wq"] + p["bq"][0]
    k = x @ p["wk"] + p["bk"][0]
    v = x @ p["wv"] + p["bv"][0]
    s = jnp.einsum("bsd,bse->bde", q, k) / math.sqrt(v.shape[-1])
    a = jax.nn.softmax(s, axis=-1)
    wv = jnp.einsum("bde,bse->bsd", a, v)
    return wv @ p["wo"] + p["bo"][0]


if __name__ == "__main__":
    B, S, D = 2, 8, 256          # input_dim=256 -> D8=32 (padded to a 128-lane seg)
    key = jax.random.PRNGKey(0)
    kx, kp = jax.random.split(key)
    x = jax.random.normal(kx, (B, S, D), jnp.float32)
    params = init_params(kp, D)

    out = attention_layer(x, params)
    out = jax.block_until_ready(out)

    ref = reference(x, params)
    assert out.shape == (B, S, D)
    err = float(jnp.max(jnp.abs(out.astype(jnp.float32) - ref)))
    # bf16 MXU operands for the two big projections + bf16 output writeback;
    # softmax itself is exact f32, so tolerance is dominated by bf16 rounding.
    assert jnp.allclose(out.astype(jnp.float32), ref, atol=3e-2, rtol=3e-2), err
    print("KERNEL_OK")
</pallas_src>

<mosaic_0001>
module attributes {stable_mosaic.version = 11 : i64} {
  func.func @_attn_kernel(%arg0: i32, %arg1: memref<1x8x256xf32, #tpu.memory_space<vmem>>, %arg2: memref<256x384xbf16, #tpu.memory_space<vmem>>, %arg3: memref<1x384xf32, #tpu.memory_space<vmem>>, %arg4: memref<32x256xbf16, #tpu.memory_space<vmem>>, %arg5: memref<1x256xf32, #tpu.memory_space<vmem>>, %arg6: memref<1x8x256xbf16, #tpu.memory_space<vmem>>) attributes {dimension_semantics = [#tpu.dimension_semantics<parallel>], iteration_bounds = array<i64: 2>, scalar_prefetch = 0 : i64, scratch_operands = 0 : i64, tpu.core_type = #tpu.core_type<tc>, window_params = [{transform_indices = @transform_0, window_bounds = array<i64: 1, 8, 256>}, {pipeline_mode = #tpu.pipeline_mode<synchronous>, transform_indices = @transform_1, window_bounds = array<i64: 256, 384>}, {pipeline_mode = #tpu.pipeline_mode<synchronous>, transform_indices = @transform_2, window_bounds = array<i64: 1, 384>}, {pipeline_mode = #tpu.pipeline_mode<synchronous>, transform_indices = @transform_3, window_bounds = array<i64: 32, 256>}, {pipeline_mode = #tpu.pipeline_mode<synchronous>, transform_indices = @transform_4, window_bounds = array<i64: 1, 256>}, {transform_indices = @transform_5, window_bounds = array<i64: 1, 8, 256>}]} {
    %c0 = arith.constant 0 : index
    %c0_0 = arith.constant 0 : index
    %c0_1 = arith.constant 0 : index
    %0 = vector.load %arg1[%c0, %c0_0, %c0_1] : memref<1x8x256xf32, #tpu.memory_space<vmem>>, vector<1x8x256xf32>
    %1 = arith.truncf %0 : vector<1x8x256xf32> to vector<1x8x256xbf16>
    %c0_2 = arith.constant 0 : index
    %c0_3 = arith.constant 0 : index
    %2 = vector.load %arg2[%c0_2, %c0_3] : memref<256x384xbf16, #tpu.memory_space<vmem>>, vector<256x384xbf16>
    %c0_4 = arith.constant 0 : index
    %c0_5 = arith.constant 0 : index
    %3 = vector.load %arg3[%c0_4, %c0_5] : memref<1x384xf32, #tpu.memory_space<vmem>>, vector<1x384xf32>
    %4 = vector.shape_cast %1 : vector<1x8x256xbf16> to vector<8x256xbf16>
    %cst = arith.constant dense<0.000000e+00> : vector<8x384xf32>
    %5 = tpu.matmul %4, %2, %cst {dimension_numbers = #tpu.dot_dimension_numbers<[1], [0], [0], [1], [0, 0, 1, 1], [], []>} : vector<8x256xbf16>, vector<256x384xbf16>, vector<8x384xf32> -> vector<8x384xf32>
    %6 = vector.shape_cast %5 : vector<8x384xf32> to vector<1x8x384xf32>
    %7 = vector.shape_cast %3 : vector<1x384xf32> to vector<1x1x384xf32>
    %8 = vector.broadcast %7 : vector<1x1x384xf32> to vector<1x8x384xf32>
    %9 = arith.addf %6, %8 : vector<1x8x384xf32>
    %10 = vector.extract_strided_slice %9 {offsets = [0, 0, 0], sizes = [1, 8, 32], strides = [1, 1, 1]} : vector<1x8x384xf32> to vector<1x8x32xf32>
    %11 = vector.extract_strided_slice %9 {offsets = [0, 0, 128], sizes = [1, 8, 32], strides = [1, 1, 1]} : vector<1x8x384xf32> to vector<1x8x32xf32>
    %12 = vector.extract_strided_slice %9 {offsets = [0, 0, 256], sizes = [1, 8, 32], strides = [1, 1, 1]} : vector<1x8x384xf32> to vector<1x8x32xf32>
    "tpu.trace_start"() <{level = 10 : i32, message = "bsd,bse->bde"}> : () -> ()
    %cst_6 = arith.constant dense<0.000000e+00> : vector<1x32x32xf32>
    %13 = tpu.matmul %10, %11, %cst_6 {dimension_numbers = #tpu.dot_dimension_numbers<[1], [1], [2], [2], [0, 0, 0, 2, 1, 2], [0], [0]>} : vector<1x8x32xf32>, vector<1x8x32xf32>, vector<1x32x32xf32> -> vector<1x32x32xf32>
    "tpu.trace_stop"() : () -> ()
    %cst_7 = arith.constant 0.176776692 : f32
    %14 = vector.broadcast %cst_7 : f32 to vector<1x32x32xf32>
    %15 = arith.mulf %13, %14 : vector<1x32x32xf32>
    %cst_8 = arith.constant dense<0xFF800000> : vector<1x32xf32>
    %16 = vector.multi_reduction <maximumf>, %15, %cst_8 [2] : vector<1x32x32xf32> to vector<1x32xf32>
    %17 = vector.shape_cast %16 : vector<1x32xf32> to vector<1x32x1xf32>
    %18 = vector.broadcast %17 : vector<1x32x1xf32> to vector<1x32x32xf32>
    %19 = arith.subf %15, %18 : vector<1x32x32xf32>
    %20 = math.exp %19 : vector<1x32x32xf32>
    %cst_9 = arith.constant dense<0.000000e+00> : vector<1x32xf32>
    %21 = vector.multi_reduction <add>, %20, %cst_9 [2] : vector<1x32x32xf32> to vector<1x32xf32>
    %22 = vector.shape_cast %21 : vector<1x32xf32> to vector<1x32x1xf32>
    %23 = vector.broadcast %22 : vector<1x32x1xf32> to vector<1x32x32xf32>
    %24 = arith.divf %20, %23 : vector<1x32x32xf32>
    "tpu.trace_start"() <{level = 10 : i32, message = "bse,bde->bsd"}> : () -> ()
    %cst_10 = arith.constant dense<0.000000e+00> : vector<1x8x32xf32>
    %25 = tpu.matmul %12, %24, %cst_10 {dimension_numbers = #tpu.dot_dimension_numbers<[2], [2], [1], [1], [0, 0, 0, 1, 1, 1], [0], [0]>} : vector<1x8x32xf32>, vector<1x32x32xf32>, vector<1x8x32xf32> -> vector<1x8x32xf32>
    "tpu.trace_stop"() : () -> ()
    %26 = arith.truncf %25 : vector<1x8x32xf32> to vector<1x8x32xbf16>
    %c0_11 = arith.constant 0 : index
    %c0_12 = arith.constant 0 : index
    %27 = vector.load %arg4[%c0_11, %c0_12] : memref<32x256xbf16, #tpu.memory_space<vmem>>, vector<32x256xbf16>
    %c0_13 = arith.constant 0 : index
    %c0_14 = arith.constant 0 : index
    %28 = vector.load %arg5[%c0_13, %c0_14] : memref<1x256xf32, #tpu.memory_space<vmem>>, vector<1x256xf32>
    %29 = vector.shape_cast %26 : vector<1x8x32xbf16> to vector<8x32xbf16>
    %cst_15 = arith.constant dense<0.000000e+00> : vector<8x256xf32>
    %30 = tpu.matmul %29, %27, %cst_15 {dimension_numbers = #tpu.dot_dimension_numbers<[1], [0], [0], [1], [0, 0, 1, 1], [], []>} : vector<8x32xbf16>, vector<32x256xbf16>, vector<8x256xf32> -> vector<8x256xf32>
    %31 = vector.shape_cast %30 : vector<8x256xf32> to vector<1x8x256xf32>
    %32 = vector.shape_cast %28 : vector<1x256xf32> to vector<1x1x256xf32>
    %33 = vector.broadcast %32 : vector<1x1x256xf32> to vector<1x8x256xf32>
    %34 = arith.addf %31, %33 : vector<1x8x256xf32>
    %35 = arith.truncf %34 : vector<1x8x256xf32> to vector<1x8x256xbf16>
    %c0_16 = arith.constant 0 : index
    %c0_17 = arith.constant 0 : index
    %c0_18 = arith.constant 0 : index
    %36 = vector.load %arg6[%c0_16, %c0_17, %c0_18] : memref<1x8x256xbf16, #tpu.memory_space<vmem>>, vector<1x8x256xbf16>
    tpu.vector_store %arg6[%c0_16, %c0_17, %c0_18], %35 {strides = array<i32>} : memref<1x8x256xbf16, #tpu.memory_space<vmem>>, vector<1x8x256xbf16>,
    return
  }
  func.func @transform_0(%arg0: i32) -> (i32, i32, i32) {
    %c0_i32 = arith.constant 0 : i32
    %c0_i32_0 = arith.constant 0 : i32
    %c0_i32_1 = arith.constant 0 : i32
    return %arg0, %c0_i32, %c0_i32_0 : i32, i32, i32
  }
  func.func @transform_1(%arg0: i32) -> (i32, i32) {
    %c0_i32 = arith.constant 0 : i32
    %c0_i32_0 = arith.constant 0 : i32
    %c0_i32_1 = arith.constant 0 : i32
    return %c0_i32, %c0_i32_0 : i32, i32
  }
  func.func @transform_2(%arg0: i32) -> (i32, i32) {
    %c0_i32 = arith.constant 0 : i32
    %c0_i32_0 = arith.constant 0 : i32
    %c0_i32_1 = arith.constant 0 : i32
    return %c0_i32, %c0_i32_0 : i32, i32
  }
  func.func @transform_3(%arg0: i32) -> (i32, i32) {
    %c0_i32 = arith.constant 0 : i32
    %c0_i32_0 = arith.constant 0 : i32
    %c0_i32_1 = arith.constant 0 : i32
    return %c0_i32, %c0_i32_0 : i32, i32
  }
  func.func @transform_4(%arg0: i32) -> (i32, i32) {
    %c0_i32 = arith.constant 0 : i32
    %c0_i32_0 = arith.constant 0 : i32
    %c0_i32_1 = arith.constant 0 : i32
    return %c0_i32, %c0_i32_0 : i32, i32
  }
  func.func @transform_5(%arg0: i32) -> (i32, i32, i32) {
    %c0_i32 = arith.constant 0 : i32
    %c0_i32_0 = arith.constant 0 : i32
    %c0_i32_1 = arith.constant 0 : i32
    return %arg0, %c0_i32, %c0_i32_0 : i32, i32, i32
  }
}

</mosaic_0001>

<llo_original>
// kernel: tpu_custom_call.1
$region0: #{tpu_custom_call.1}
  #allocation0 [shape = 'u32[]', space=smem, size = 0x4, offset = 0x4, fixed_abs, tag = 'smem constant byte address 0x4 - core index']
  #allocation1 [shape = 'u32[72,128]{1,0:T(1,128)}', space=vmem, size = 0x9000, scoped, tag = 'internal scratch']
  %s0 = inlined_call_operand.hbm [shape: f32[2,8,256], index: 0, kind: input, shape index: {}]
  %s1 = inlined_call_operand.hbm [shape: bf16[256,384], index: 1, kind: input, shape index: {}]
  %s2 = inlined_call_operand.hbm [shape: f32[1,384], index: 2, kind: input, shape index: {}]
  %s3 = inlined_call_operand.hbm [shape: bf16[32,256], index: 3, kind: input, shape index: {}]
  %s4 = inlined_call_operand.vmem [shape: f32[1,256], index: 4, kind: input, shape index: {}]
  %s5 = inlined_call_operand.hbm [shape: bf16[2,8,256], index: 5, kind: output, shape index: {}]
  %s6 = sld [smem:[#allocation0]]
  $region69: #{tpu_custom_call.1} parent=0
    _
  %s8 = ssub.s32 1, %s6
  %s9 = scalar_select 0, %s8, %s6
  $region1: #{tpu_custom_call.1} parent=0
    #allocation2 [shape = 'u8[16384]{0}', space=vmem, size = 0x4000, scoped, tag = 'input window, operand 0']
    #allocation3 [shape = 's32[2]{0}', space=sflag, size = 0x8, scoped, tag = 'scoped memory for tpu_custom_call.1']
    #allocation4 [shape = 's32[2]{0}', space=sflag, size = 0x8, scoped, tag = 'scoped memory for tpu_custom_call.1']
    #allocation5 [shape = 'u8[196608]{0}', space=vmem, size = 0x30000, scoped, tag = 'input window, operand 1, single buffered']
    #allocation6 [shape = 's32[1]{0}', space=sflag, size = 0x4, scoped, tag = 'scoped memory for tpu_custom_call.1']
    #allocation7 [shape = 'u8[1536]{0}', space=vmem, size = 0x800, scoped, tag = 'input window, operand 2, single buffered']
    #allocation8 [shape = 'u8[16384]{0}', space=vmem, size = 0x4000, scoped, tag = 'input window, operand 3, single buffered']
    #allocation9 [shape = 's32[1]{0}', space=sflag, size = 0x4, scoped, tag = 'scoped memory for tpu_custom_call.1']
    #allocation10 [shape = 'u8[8192]{0}', space=vmem, size = 0x2000, scoped, tag = 'output window, operand 0']
    %10 = vsyncpa [#allocation3], 0
    %s11 = scalar_lea.sflag [#allocation3], 1
    %12 = vsyncpa %s11, 0
    %13 = vsyncpa [#allocation6], 0
    %14 = vsyncpa [#allocation9], 0
    %15 = vsyncpa [#allocation4], 0
    %s16 = scalar_lea.sflag [#allocation4], 1
    %17 = vsyncpa %s16, 0
    loop: start=0, step=1, limit=4
    $region2: #{tpu_custom_call.1} parent=1 // loop_pre_header
      _
    $region3: #{tpu_custom_call.1} parent=1 // loop_header
      %s19 = sphi 0, %s23
      %p20 = scmp.ge.s32.totalorder %s19, 4
      %s29 = sphi 0, %s31
      %s32 = sphi 0, %s29
      %s33 = sphi 0, %s32
      %s49 = sphi 0, %s33
      %s53 = sphi 0, %s53
      %s55 = sphi 0, %s53
      %s56 = sphi 0, %s55
      %s70 = sphi 0, %s56
      %s74 = sphi 0, %s74
      %s76 = sphi 0, %s74
      %s77 = sphi 0, %s76
      %s91 = sphi 0, %s77
      %s95 = sphi 0, %s95
      %s97 = sphi 0, %s95
      %s98 = sphi 0, %s97
      %s112 = sphi 0, %s98
      %s116 = sphi 0, %s116
      %s118 = sphi 0, %s116
      %s119 = sphi 0, %s118
      %s133 = sphi 0, %s119
      %s139 = sphi 0, %s141
      %s142 = sphi 0, %s139
      %s143 = sphi 0, %s142
      %s159 = sphi 0, %s143
    $region4: #{tpu_custom_call.1} parent=1 // loop_header_branch
      %22 = sbr.rel (%p20) target = $region8
    $region5: #{tpu_custom_call.1} parent=1 // loop_body
      %s24 = ssub.s32 %s19, 1
      %s25 = ssub.s32 %s19, 2
      %s26 = sadd.s32 %s19, 1
      %s27 = ssub.s32 %s19, %s26
      %p28 = scmp.eq.s32.totalorder %s27, 0
      %s30 = sadd.s32 %s29, 1
      %s31 = scalar_select %p28, %s29, %s30
      %p34 = pneg %p28
      %p35 = scmp.eq.s32.totalorder %s19, 1
      %p36 = por %p34, %p35
      %p37 = scmp.ne.s32.totalorder %s29, %s32
      %p38 = scmp.eq.s32.totalorder %s19, 0
      %p39 = por %p37, %p38
      %p40 = scmp.ne.s32.totalorder %s29, %s32
      %p41 = scmp.eq.s32.totalorder %s24, 1
      %p42 = por %p40, %p41
      %p43 = scmp.ne.s32.totalorder %s32, %s33
      %p44 = scmp.eq.s32.totalorder %s24, 0
      %p45 = por %p43, %p44
      %p46 = scmp.ne.s32.totalorder %s32, %s33
      %p47 = scmp.eq.s32.totalorder %s25, 1
      %p48 = por %p46, %p47
      %p50 = scmp.ne.s32.totalorder %s33, %s49
      %p51 = scmp.eq.s32.totalorder %s25, 0
      %p52 = por %p50, %p51
      %s54 = sadd.s32 %s53, 1
      %p57 = scmp.eq.s32.totalorder %s19, 1
      %p58 = scmp.ne.s32.totalorder %s53, %s55
      %p59 = scmp.eq.s32.totalorder %s19, 0
      %p60 = por %p58, %p59
      %p61 = scmp.ne.s32.totalorder %s53, %s55
      %p62 = scmp.eq.s32.totalorder %s24, 1
      %p63 = por %p61, %p62
      %p64 = scmp.ne.s32.totalorder %s55, %s56
      %p65 = scmp.eq.s32.totalorder %s24, 0
      %p66 = por %p64, %p65
      %p67 = scmp.ne.s32.totalorder %s55, %s56
      %p68 = scmp.eq.s32.totalorder %s25, 1
      %p69 = por %p67, %p68
      %p71 = scmp.ne.s32.totalorder %s56, %s70
      %p72 = scmp.eq.s32.totalorder %s25, 0
      %p73 = por %p71, %p72
      %s75 = sadd.s32 %s74, 1
      %p78 = scmp.eq.s32.totalorder %s19, 1
      %p79 = scmp.ne.s32.totalorder %s74, %s76
      %p80 = scmp.eq.s32.totalorder %s19, 0
      %p81 = por %p79, %p80
      %p82 = scmp.ne.s32.totalorder %s74, %s76
      %p83 = scmp.eq.s32.totalorder %s24, 1
      %p84 = por %p82, %p83
      %p85 = scmp.ne.s32.totalorder %s76, %s77
      %p86 = scmp.eq.s32.totalorder %s24, 0
      %p87 = por %p85, %p86
      %p88 = scmp.ne.s32.totalorder %s76, %s77
      %p89 = scmp.eq.s32.totalorder %s25, 1
      %p90 = por %p88, %p89
      %p92 = scmp.ne.s32.totalorder %s77, %s91
      %p93 = scmp.eq.s32.totalorder %s25, 0
      %p94 = por %p92, %p93
      %s96 = sadd.s32 %s95, 1
      %p99 = scmp.eq.s32.totalorder %s19, 1
      %p100 = scmp.ne.s32.totalorder %s95, %s97
      %p101 = scmp.eq.s32.totalorder %s19, 0
      %p102 = por %p100, %p101
      %p103 = scmp.ne.s32.totalorder %s95, %s97
      %p104 = scmp.eq.s32.totalorder %s24, 1
      %p105 = por %p103, %p104
      %p106 = scmp.ne.s32.totalorder %s97, %s98
      %p107 = scmp.eq.s32.totalorder %s24, 0
      %p108 = por %p106, %p107
      %p109 = scmp.ne.s32.totalorder %s97, %s98
      %p110 = scmp.eq.s32.totalorder %s25, 1
      %p111 = por %p109, %p110
      %p113 = scmp.ne.s32.totalorder %s98, %s112
      %p114 = scmp.eq.s32.totalorder %s25, 0
      %p115 = por %p113, %p114
      %s117 = sadd.s32 %s116, 1
      %p120 = scmp.eq.s32.totalorder %s19, 1
      %p121 = scmp.ne.s32.totalorder %s116, %s118
      %p122 = scmp.eq.s32.totalorder %s19, 0
      %p123 = por %p121, %p122
      %p124 = scmp.ne.s32.totalorder %s116, %s118
      %p125 = scmp.eq.s32.totalorder %s24, 1
      %p126 = por %p124, %p125
      %p127 = scmp.ne.s32.totalorder %s118, %s119
      %p128 = scmp.eq.s32.totalorder %s24, 0
      %p129 = por %p127, %p128
      %p130 = scmp.ne.s32.totalorder %s118, %s119
      %p131 = scmp.eq.s32.totalorder %s25, 1
      %p132 = por %p130, %p131
      %p134 = scmp.ne.s32.totalorder %s119, %s133
      %p135 = scmp.eq.s32.totalorder %s25, 0
      %p136 = por %p134, %p135
      %s137 = ssub.s32 %s19, %s26
      %p138 = scmp.eq.s32.totalorder %s137, 0
      %s140 = sadd.s32 %s139, 1
      %s141 = scalar_select %p138, %s139, %s140
      %p144 = pneg %p138
      %p145 = scmp.eq.s32.totalorder %s19, 1
      %p146 = por %p144, %p145
      %p147 = scmp.ne.s32.totalorder %s139, %s142
      %p148 = scmp.eq.s32.totalorder %s19, 0
      %p149 = por %p147, %p148
      %p150 = scmp.ne.s32.totalorder %s139, %s142
      %p151 = scmp.eq.s32.totalorder %s24, 1
      %p152 = por %p150, %p151
      %p153 = scmp.ne.s32.totalorder %s142, %s143
      %p154 = scmp.eq.s32.totalorder %s24, 0
      %p155 = por %p153, %p154
      %p156 = scmp.ne.s32.totalorder %s142, %s143
      %p157 = scmp.eq.s32.totalorder %s25, 1
      %p158 = por %p156, %p157
      %p160 = scmp.ne.s32.totalorder %s143, %s159
      %p161 = scmp.eq.s32.totalorder %s25, 0
      %p162 = por %p160, %p161
      %p163 = scmp.le.s32.totalorder 1, %s19
      %p164 = scmp.lt.s32.totalorder %s19, 3
      %p165 = pnand %p163, %p164
      %p166 = pneg %p165
      // Predicated region
      $region9: #{tpu_custom_call.1} parent=5 // pred_check
        _
      $region10: #{tpu_custom_call.1} parent=5 // pred_check_branch
        %168 = sbr.rel (%p165) target = $region12
      $region11: #{tpu_custom_call.1} parent=5 // pred_region
        %s169 = ssub.s32 %s19, 1
        // Predicated region
        $region13: #{tpu_custom_call.1} parent=11 // pred_check
          %p170 = pneg %p66
        $region14: #{tpu_custom_call.1} parent=11 // pred_check_branch
          %172 = sbr.rel (%p170) target = $region16
        $region15: #{tpu_custom_call.1} parent=11 // pred_region
          %174 = vsyncadd [#allocation6], 0
          %s175 = sshll.u32 %s1, 4
          %s176 = int_to_ptr.hbm [resolvable:$true] %s175
          %s177 = sshll.u32 [#allocation5], 4
          %s178 = int_to_ptr.vmem [resolvable:$true] %s177
          %183 = dma.hbm_to_vmem [thread:$0]  %s176, 6144, %s178, [#allocation6], 192, 192, 12
        $region16: #{tpu_custom_call.1} parent=11 // pred_fallthru
          _
        // Predicated region
        $region17: #{tpu_custom_call.1} parent=11 // pred_check
          %p184 = pneg %p87
        $region18: #{tpu_custom_call.1} parent=11 // pred_check_branch
          %186 = sbr.rel (%p184) target = $region20
        $region19: #{tpu_custom_call.1} parent=11 // pred_region
          %188 = vsyncadd [#allocation6], 0
          %s190 = sshll.u32 %s2, 4
          %s191 = int_to_ptr.hbm [resolvable:$true] %s190
          %s192 = sshll.u32 [#allocation7], 4
          %s193 = int_to_ptr.vmem [resolvable:$true] %s192
          %195 = dma.hbm_to_vmem [thread:$0]  %s191, 48, %s193, [#allocation6]
        $region20: #{tpu_custom_call.1} parent=11 // pred_fallthru
          _
        // Predicated region
        $region21: #{tpu_custom_call.1} parent=11 // pred_check
          %p196 = pneg %p108
        $region22: #{tpu_custom_call.1} parent=11 // pred_check_branch
          %198 = sbr.rel (%p196) target = $region24
        $region23: #{tpu_custom_call.1} parent=11 // pred_region
          %200 = vsyncadd [#allocation9], 0
          %s201 = sshll.u32 %s3, 4
          %s202 = int_to_ptr.hbm [resolvable:$true] %s201
          %s203 = sshll.u32 [#allocation8], 4
          %s204 = int_to_ptr.vmem [resolvable:$true] %s203
          %209 = dma.hbm_to_vmem [thread:$0]  %s202, 512, %s204, [#allocation9], 128, 128, 8
        $region24: #{tpu_custom_call.1} parent=11 // pred_fallthru
          _
        // Predicated region
        $region25: #{tpu_custom_call.1} parent=11 // pred_check
          %p210 = pneg %p129
        $region26: #{tpu_custom_call.1} parent=11 // pred_check_branch
          %212 = sbr.rel (%p210) target = $region28
        $region27: #{tpu_custom_call.1} parent=11 // pred_region
          _
        $region28: #{tpu_custom_call.1} parent=11 // pred_fallthru
          _
      $region12: #{tpu_custom_call.1} parent=5 // pred_fallthru
        _
      %p213 = scmp.lt.s32.totalorder %s19, 2
      // Predicated region
      $region29: #{tpu_custom_call.1} parent=5 // pred_check
        %p214 = pneg %p213
      $region30: #{tpu_custom_call.1} parent=5 // pred_check_branch
        %216 = sbr.rel (%p214) target = $region32
      $region31: #{tpu_custom_call.1} parent=5 // pred_region
        // Predicated region
        $region33: #{tpu_custom_call.1} parent=31 // pred_check
          %p217 = pneg %p39
        $region34: #{tpu_custom_call.1} parent=31 // pred_check_branch
          %219 = sbr.rel (%p217) target = $region36
        $region35: #{tpu_custom_call.1} parent=31 // pred_region
          %s220 = sand.u32 %s29, 1
          %s221 = scalar_lea.sflag [#allocation3], %s220
          %s222 = sand.u32 %s29, 1
          %s223 = smul.addr %s222, 16
          %s224 = scalar_lea.vmem [#allocation2], %s223
          %226 = vsyncadd %s221, 0
          %s227 = smul.addr %s19, 2
          %s228 = smul.addr %s227, 8
          %s229 = scalar_lea.hbm %s0, %s228
          %s231 = sshll.u32 %s229, 4
          %s232 = int_to_ptr.hbm [resolvable:$true] %s231
          %s233 = sshll.u32 %s224, 4
          %s234 = int_to_ptr.vmem [resolvable:$true] %s233
          %236 = dma.hbm_to_vmem [thread:$0]  %s232, 256, %s234, %s221
        $region36: #{tpu_custom_call.1} parent=31 // pred_fallthru
          _
      $region32: #{tpu_custom_call.1} parent=5 // pred_fallthru
        _
      %p237 = scmp.le.s32.totalorder 1, %s19
      %p238 = scmp.lt.s32.totalorder %s19, 3
      %p239 = pnand %p237, %p238
      %p240 = pneg %p239
      // Predicated region
      $region37: #{tpu_custom_call.1} parent=5 // pred_check
        _
      $region38: #{tpu_custom_call.1} parent=5 // pred_check_branch
        %242 = sbr.rel (%p239) target = $region40
      $region39: #{tpu_custom_call.1} parent=5 // pred_region
        %s243 = ssub.s32 %s19, 1
        %s244 = sand.u32 %s32, 1
        %s245 = scalar_lea.sflag [#allocation3], %s244
        %s246 = sand.u32 %s32, 1
        %s247 = smul.addr %s246, 16
        %s248 = scalar_lea.vmem [#allocation2], %s247
        // Predicated region
        $region41: #{tpu_custom_call.1} parent=39 // pred_check
          %p249 = pneg %p45
        $region42: #{tpu_custom_call.1} parent=39 // pred_check_branch
          %251 = sbr.rel (%p249) target = $region44
        $region43: #{tpu_custom_call.1} parent=39 // pred_region
          %253 = dma.done %s245, 256
        $region44: #{tpu_custom_call.1} parent=39 // pred_fallthru
          _
        // Predicated region
        $region45: #{tpu_custom_call.1} parent=39 // pred_check
          %p254 = pneg %p66
        $region46: #{tpu_custom_call.1} parent=39 // pred_check_branch
          %256 = sbr.rel (%p254) target = $region48
        $region47: #{tpu_custom_call.1} parent=39 // pred_region
          %258 = dma.done [#allocation6], 6144
        $region48: #{tpu_custom_call.1} parent=39 // pred_fallthru
          _
        // Predicated region
        $region49: #{tpu_custom_call.1} parent=39 // pred_check
          %p259 = pneg %p87
        $region50: #{tpu_custom_call.1} parent=39 // pred_check_branch
          %261 = sbr.rel (%p259) target = $region52
        $region51: #{tpu_custom_call.1} parent=39 // pred_region
          %263 = dma.done [#allocation6], 48
        $region52: #{tpu_custom_call.1} parent=39 // pred_fallthru
          _
        // Predicated region
        $region53: #{tpu_custom_call.1} parent=39 // pred_check
          %p264 = pneg %p108
        $region54: #{tpu_custom_call.1} parent=39 // pred_check_branch
          %266 = sbr.rel (%p264) target = $region56
        $region55: #{tpu_custom_call.1} parent=39 // pred_region
          %268 = dma.done [#allocation9], 512
        $region56: #{tpu_custom_call.1} parent=39 // pred_fallthru
          _
        %s269 = sand.u32 %s32, 1
        %s270 = scalar_lea.sflag [#allocation3], %s269
        %s271 = sand.u32 %s32, 1
        %s272 = smul.addr %s271, 16
        %s273 = scalar_lea.vmem [#allocation2], %s272
        %p274 = pneg %p45
        %p275 = pneg %p42
        %p276 = pneg %p66
        %p277 = pneg %p63
        %p278 = pneg %p87
        %p279 = pneg %p84
        %p280 = pneg %p108
        %p281 = pneg %p105
        %p282 = pneg %p129
        %p283 = pneg %p126
        %p284 = pneg %p155
        %p285 = pneg %p152
        %s286 = sand.u32 %s142, 1
        %s287 = scalar_lea.sflag [#allocation4], %s286
        %s288 = sand.u32 %s142, 1
        %s289 = smul.addr %s288, 8
        %s290 = scalar_lea.vmem [#allocation10], %s289
        %v292 = vld [vmem:[%s248] sm:$0xff]
        %v293 = vld [vmem:[%s248 + $0x8] sm:$0xff]
        %v294 = vpack.c.bf16 %v293, %v292
        %v295 = vld [vmem:[#allocation5] sm:$0xff]
        %v296 = vld [vmem:[#allocation5 + $0x8] sm:$0xf]
        %v297 = vld [vmem:[#allocation5 + $0xc] sm:$0xff]
        %v298 = vld [vmem:[#allocation5 + $0x14] sm:$0xf]
        %v299 = vld [vmem:[#allocation5 + $0x18] sm:$0xff]
        %v300 = vld [vmem:[#allocation5 + $0x20] sm:$0xf]
        %v301 = vld [vmem:[#allocation5 + $0x24] sm:$0xff]
        %v302 = vld [vmem:[#allocation5 + $0x2c] sm:$0xf]
        %v303 = vld [vmem:[#allocation5 + $0x30] sm:$0xff]
        %v304 = vld [vmem:[#allocation5 + $0x38] sm:$0xf]
        %v305 = vld [vmem:[#allocation5 + $0x3c] sm:$0xff]
        %v306 = vld [vmem:[#allocation5 + $0x44] sm:$0xf]
        %v307 = vld [vmem:[#allocation5 + $0x48] sm:$0xff]
        %v308 = vld [vmem:[#allocation5 + $0x50] sm:$0xf]
        %v309 = vld [vmem:[#allocation5 + $0x54] sm:$0xff]
        %v310 = vld [vmem:[#allocation5 + $0x5c] sm:$0xf]
        %v311 = vld [vmem:[#allocation5 + $0x60] sm:$0xff]
        %v312 = vld [vmem:[#allocation5 + $0x68] sm:$0xf]
        %v313 = vld [vmem:[#allocation5 + $0x6c] sm:$0xff]
        %v314 = vld [vmem:[#allocation5 + $0x74] sm:$0xf]
        %v315 = vld [vmem:[#allocation5 + $0x78] sm:$0xff]
        %v316 = vld [vmem:[#allocation5 + $0x80] sm:$0xf]
        %v317 = vld [vmem:[#allocation5 + $0x84] sm:$0xff]
        %v318 = vld [vmem:[#allocation5 + $0x8c] sm:$0xf]
        %v319 = vld [vmem:[#allocation5 + $0x90] sm:$0xff]
        %v320 = vld [vmem:[#allocation5 + $0x98] sm:$0xf]
        %v321 = vld [vmem:[#allocation5 + $0x9c] sm:$0xff]
        %v322 = vld [vmem:[#allocation5 + $0xa4] sm:$0xf]
        %v323 = vld [vmem:[#allocation5 + $0xa8] sm:$0xff]
        %v324 = vld [vmem:[#allocation5 + $0xb0] sm:$0xf]
        %v325 = vld [vmem:[#allocation5 + $0xb4] sm:$0xff]
        %v326 = vld [vmem:[#allocation5 + $0xbc] sm:$0xf]
        %v327 = vld [vmem:[#allocation5 + $0xc0] sm:$0xff]
        %v328 = vld [vmem:[#allocation5 + $0xc8] sm:$0xf]
        %v329 = vld [vmem:[#allocation5 + $0xcc] sm:$0xff]
        %v330 = vld [vmem:[#allocation5 + $0xd4] sm:$0xf]
        %v331 = vld [vmem:[#allocation5 + $0xd8] sm:$0xff]
        %v332 = vld [vmem:[#allocation5 + $0xe0] sm:$0xf]
        %v333 = vld [vmem:[#allocation5 + $0xe4] sm:$0xff]
        %v334 = vld [vmem:[#allocation5 + $0xec] sm:$0xf]
        %v335 = vld [vmem:[#allocation5 + $0xf0] sm:$0xff]
        %v336 = vld [vmem:[#allocation5 + $0xf8] sm:$0xf]
        %v337 = vld [vmem:[#allocation5 + $0xfc] sm:$0xff]
        %v338 = vld [vmem:[#allocation5 + $0x104] sm:$0xf]
        %v339 = vld [vmem:[#allocation5 + $0x108] sm:$0xff]
        %v340 = vld [vmem:[#allocation5 + $0x110] sm:$0xf]
        %v341 = vld [vmem:[#allocation5 + $0x114] sm:$0xff]
        %v342 = vld [vmem:[#allocation5 + $0x11c] sm:$0xf]
        %v343 = vld [vmem:[#allocation5 + $0x120] sm:$0xff]
        %v344 = vld [vmem:[#allocation5 + $0x128] sm:$0xf]
        %v345 = vld [vmem:[#allocation5 + $0x12c] sm:$0xff]
        %v346 = vld [vmem:[#allocation5 + $0x134] sm:$0xf]
        %v347 = vld [vmem:[#allocation5 + $0x138] sm:$0xff]
        %v348 = vld [vmem:[#allocation5 + $0x140] sm:$0xf]
        %v349 = vld [vmem:[#allocation5 + $0x144] sm:$0xff]
        %v350 = vld [vmem:[#allocation5 + $0x14c] sm:$0xf]
        %v351 = vld [vmem:[#allocation5 + $0x150] sm:$0xff]
        %v352 = vld [vmem:[#allocation5 + $0x158] sm:$0xf]
        %v353 = vld [vmem:[#allocation5 + $0x15c] sm:$0xff]
        %v354 = vld [vmem:[#allocation5 + $0x164] sm:$0xf]
        %v355 = vld [vmem:[#allocation5 + $0x168] sm:$0xff]
        %v356 = vld [vmem:[#allocation5 + $0x170] sm:$0xf]
        %v357 = vld [vmem:[#allocation5 + $0x174] sm:$0xff]
        %v358 = vld [vmem:[#allocation5 + $0x17c] sm:$0xf]
        %v359 = vld [vmem:[#allocation7] sm:$0x7]
        %v361 = vunpack.c.l.b16 %v294
        %v362 = vunpack.c.h.b16 %v294
        %v363 = vpack.c.b16 %v361, %v361
        %v364 = vpack.c.b16 %v362, %v362
        %v431 = vunpack.c.l.b16 %v295
        %v432 = vunpack.c.h.b16 %v295
        %v433 = vunpack.c.l.b16 %v296
        %v434 = vunpack.c.l.b16 %v297
        %v435 = vunpack.c.h.b16 %v297
        %v436 = vunpack.c.l.b16 %v298
        %v437 = vunpack.c.l.b16 %v299
        %v438 = vunpack.c.h.b16 %v299
        %v439 = vunpack.c.l.b16 %v300
        %v440 = vunpack.c.l.b16 %v301
        %v441 = vunpack.c.h.b16 %v301
        %v442 = vunpack.c.l.b16 %v302
        %v443 = vunpack.c.l.b16 %v303
        %v444 = vunpack.c.h.b16 %v303
        %v445 = vunpack.c.l.b16 %v304
        %v446 = vunpack.c.l.b16 %v305
        %v447 = vunpack.c.h.b16 %v305
        %v448 = vunpack.c.l.b16 %v306
        %v449 = vunpack.c.l.b16 %v307
        %v450 = vunpack.c.h.b16 %v307
        %v451 = vunpack.c.l.b16 %v308
        %v452 = vunpack.c.l.b16 %v309
        %v453 = vunpack.c.h.b16 %v309
        %v454 = vunpack.c.l.b16 %v310
        %v455 = vunpack.c.l.b16 %v311
        %v456 = vunpack.c.h.b16 %v311
        %v457 = vunpack.c.l.b16 %v312
        %v458 = vunpack.c.l.b16 %v313
        %v459 = vunpack.c.h.b16 %v313
        %v460 = vunpack.c.l.b16 %v314
        %v461 = vunpack.c.l.b16 %v315
        %v462 = vunpack.c.h.b16 %v315
        %v463 = vunpack.c.l.b16 %v316
        %v464 = vunpack.c.l.b16 %v317
        %v465 = vunpack.c.h.b16 %v317
        %v466 = vunpack.c.l.b16 %v318
        %v467 = vunpack.c.l.b16 %v319
        %v468 = vunpack.c.h.b16 %v319
        %v469 = vunpack.c.l.b16 %v320
        %v470 = vunpack.c.l.b16 %v321
        %v471 = vunpack.c.h.b16 %v321
        %v472 = vunpack.c.l.b16 %v322
        %v473 = vunpack.c.l.b16 %v323
        %v474 = vunpack.c.h.b16 %v323
        %v475 = vunpack.c.l.b16 %v324
        %v476 = vunpack.c.l.b16 %v325
        %v477 = vunpack.c.h.b16 %v325
        %v478 = vunpack.c.l.b16 %v326
        %v479 = vunpack.c.l.b16 %v327
        %v480 = vunpack.c.h.b16 %v327
        %v481 = vunpack.c.l.b16 %v328
        %v482 = vunpack.c.l.b16 %v329
        %v483 = vunpack.c.h.b16 %v329
        %v484 = vunpack.c.l.b16 %v330
        %v485 = vunpack.c.l.b16 %v331
        %v486 = vunpack.c.h.b16 %v331
        %v487 = vunpack.c.l.b16 %v332
        %v488 = vunpack.c.l.b16 %v333
        %v489 = vunpack.c.h.b16 %v333
        %v490 = vunpack.c.l.b16 %v334
        %v491 = vunpack.c.l.b16 %v335
        %v492 = vunpack.c.h.b16 %v335
        %v493 = vunpack.c.l.b16 %v336
        %v494 = vunpack.c.l.b16 %v337
        %v495 = vunpack.c.h.b16 %v337
        %v496 = vunpack.c.l.b16 %v338
        %v497 = vunpack.c.l.b16 %v339
        %v498 = vunpack.c.h.b16 %v339
        %v499 = vunpack.c.l.b16 %v340
        %v500 = vunpack.c.l.b16 %v341
        %v501 = vunpack.c.h.b16 %v341
        %v502 = vunpack.c.l.b16 %v342
        %v503 = vunpack.c.l.b16 %v343
        %v504 = vunpack.c.h.b16 %v343
        %v505 = vunpack.c.l.b16 %v344
        %v506 = vunpack.c.l.b16 %v345
        %v507 = vunpack.c.h.b16 %v345
        %v508 = vunpack.c.l.b16 %v346
        %v509 = vunpack.c.l.b16 %v347
        %v510 = vunpack.c.h.b16 %v347
        %v511 = vunpack.c.l.b16 %v348
        %v512 = vunpack.c.l.b16 %v349
        %v513 = vunpack.c.h.b16 %v349
        %v514 = vunpack.c.l.b16 %v350
        %v515 = vunpack.c.l.b16 %v351
        %v516 = vunpack.c.h.b16 %v351
        %v517 = vunpack.c.l.b16 %v352
        %v518 = vunpack.c.l.b16 %v353
        %v519 = vunpack.c.h.b16 %v353
        %v520 = vunpack.c.l.b16 %v354
        %v521 = vunpack.c.l.b16 %v355
        %v522 = vunpack.c.h.b16 %v355
        %v523 = vunpack.c.l.b16 %v356
        %v524 = vunpack.c.l.b16 %v357
        %v525 = vunpack.c.h.b16 %v357
        %v526 = vunpack.c.l.b16 %v358
        %v527 = vpack.c.b16 %v434, %v431
        %v528 = vpack.c.b16 %v435, %v432
        %v529 = vpack.c.b16 %v436, %v433
        %v530 = vpack.c.b16 %v440, %v437
        %v531 = vpack.c.b16 %v441, %v438
        %v532 = vpack.c.b16 %v442, %v439
        %v533 = vpack.c.b16 %v446, %v443
        %v534 = vpack.c.b16 %v447, %v444
        %v535 = vpack.c.b16 %v448, %v445
        %v536 = vpack.c.b16 %v452, %v449
        %v537 = vpack.c.b16 %v453, %v450
        %v538 = vpack.c.b16 %v454, %v451
        %v539 = vpack.c.b16 %v458, %v455
        %v540 = vpack.c.b16 %v459, %v456
        %v541 = vpack.c.b16 %v460, %v457
        %v542 = vpack.c.b16 %v464, %v461
        %v543 = vpack.c.b16 %v465, %v462
        %v544 = vpack.c.b16 %v466, %v463
        %v545 = vpack.c.b16 %v470, %v467
        %v546 = vpack.c.b16 %v471, %v468
        %v547 = vpack.c.b16 %v472, %v469
        %v548 = vpack.c.b16 %v476, %v473
        %v549 = vpack.c.b16 %v477, %v474
        %v550 = vpack.c.b16 %v478, %v475
        %v551 = vpack.c.b16 %v482, %v479
        %v552 = vpack.c.b16 %v483, %v480
        %v553 = vpack.c.b16 %v484, %v481
        %v554 = vpack.c.b16 %v488, %v485
        %v555 = vpack.c.b16 %v489, %v486
        %v556 = vpack.c.b16 %v490, %v487
        %v557 = vpack.c.b16 %v494, %v491
        %v558 = vpack.c.b16 %v495, %v492
        %v559 = vpack.c.b16 %v496, %v493
        %v560 = vpack.c.b16 %v500, %v497
        %v561 = vpack.c.b16 %v501, %v498
        %v562 = vpack.c.b16 %v502, %v499
        %v563 = vpack.c.b16 %v506, %v503
        %v564 = vpack.c.b16 %v507, %v504
        %v565 = vpack.c.b16 %v508, %v505
        %v566 = vpack.c.b16 %v512, %v509
        %v567 = vpack.c.b16 %v513, %v510
        %v568 = vpack.c.b16 %v514, %v511
        %v569 = vpack.c.b16 %v518, %v515
        %v570 = vpack.c.b16 %v519, %v516
        %v571 = vpack.c.b16 %v520, %v517
        %v572 = vpack.c.b16 %v524, %v521
        %v573 = vpack.c.b16 %v525, %v522
        %v574 = vpack.c.b16 %v526, %v523
        %623 = vmatpush.bf16.msra.mxu0 %v548
        %624 = vmatpush.bf16.msra.mxu0 %v545
        %625 = vmatpush.bf16.msra.mxu0 %v542
        %626 = vmatpush.bf16.msra.mxu0 %v539
        %627 = vmatpush.bf16.msra.mxu0 %v536
        %628 = vmatpush.bf16.msra.mxu0 %v533
        %629 = vmatpush.bf16.msra.mxu0 %v530
        %630 = vmatpush.bf16.msra.mxu0 %v527
        %631 = vmatmul.bf16.gmra.mxu0 %v363
        %v632 = vpop.f32.mrf.mxu0
        %v633 = vadd.f32 0.0, %v632
        %v634 = vpop.f32.mrf.mxu0
        %635 = vdwg.mxu0
        %636 = vmatpush.bf16.msra.mxu0 %v572
        %637 = vmatpush.bf16.msra.mxu0 %v569
        %638 = vmatpush.bf16.msra.mxu0 %v566
        %639 = vmatpush.bf16.msra.mxu0 %v563
        %640 = vmatpush.bf16.msra.mxu0 %v560
        %641 = vmatpush.bf16.msra.mxu0 %v557
        %642 = vmatpush.bf16.msra.mxu0 %v554
        %643 = vmatpush.bf16.msra.mxu0 %v551
        %644 = vmatmul.bf16.gmra.mxu0 %v364
        %v645 = vpop.f32.mrf.mxu0
        %v646 = vadd.f32 %v633, %v645
        %v647 = vpop.f32.mrf.mxu0
        %648 = vdwg.mxu0
        %649 = vmatpush.bf16.msra.mxu0 %v549
        %650 = vmatpush.bf16.msra.mxu0 %v546
        %651 = vmatpush.bf16.msra.mxu0 %v543
        %652 = vmatpush.bf16.msra.mxu0 %v540
        %653 = vmatpush.bf16.msra.mxu0 %v537
        %654 = vmatpush.bf16.msra.mxu0 %v534
        %655 = vmatpush.bf16.msra.mxu0 %v531
        %656 = vmatpush.bf16.msra.mxu0 %v528
        %657 = vmatmul.bf16.gmra.mxu0 %v363
        %v658 = vpop.f32.mrf.mxu0
        %v659 = vadd.f32 0.0, %v658
        %v660 = vpop.f32.mrf.mxu0
        %661 = vdwg.mxu0
        %662 = vmatpush.bf16.msra.mxu0 %v573
        %663 = vmatpush.bf16.msra.mxu0 %v570
        %664 = vmatpush.bf16.msra.mxu0 %v567
        %665 = vmatpush.bf16.msra.mxu0 %v564
        %666 = vmatpush.bf16.msra.mxu0 %v561
        %667 = vmatpush.bf16.msra.mxu0 %v558
        %668 = vmatpush.bf16.msra.mxu0 %v555
        %669 = vmatpush.bf16.msra.mxu0 %v552
        %670 = vmatmul.bf16.gmra.mxu0 %v364
        %v671 = vpop.f32.mrf.mxu0
        %v672 = vadd.f32 %v659, %v671
        %v673 = vpop.f32.mrf.mxu0
        %674 = vdwg.mxu0
        %675 = vmatpush.bf16.msra.mxu0 %v550
        %676 = vmatpush.bf16.msra.mxu0 %v547
        %677 = vmatpush.bf16.msra.mxu0 %v544
        %678 = vmatpush.bf16.msra.mxu0 %v541
        %679 = vmatpush.bf16.msra.mxu0 %v538
        %680 = vmatpush.bf16.msra.mxu0 %v535
        %681 = vmatpush.bf16.msra.mxu0 %v532
        %682 = vmatpush.bf16.msra.mxu0 %v529
        %683 = vmatmul.bf16.gmra.mxu0 %v363
        %v684 = vpop.f32.mrf.mxu0
        %v685 = vadd.f32 0.0, %v684
        %v686 = vpop.f32.mrf.mxu0
        %687 = vdwg.mxu0
        %688 = vmatpush.bf16.msra.mxu0 %v574
        %689 = vmatpush.bf16.msra.mxu0 %v571
        %690 = vmatpush.bf16.msra.mxu0 %v568
        %691 = vmatpush.bf16.msra.mxu0 %v565
        %692 = vmatpush.bf16.msra.mxu0 %v562
        %693 = vmatpush.bf16.msra.mxu0 %v559
        %694 = vmatpush.bf16.msra.mxu0 %v556
        %695 = vmatpush.bf16.msra.mxu0 %v553
        %696 = vmatmul.bf16.gmra.mxu0 %v364
        %v697 = vpop.f32.mrf.mxu0
        %v698 = vadd.f32 %v685, %v697
        %v699 = vpop.f32.mrf.mxu0
        %700 = vdwg.mxu0
        %v702 = vperm.slane %v359, 0
        %v703 = vperm.slane %v359, 1
        %v704 = vperm.slane %v359, 2
        %v708 = vadd.f32 %v646, %v702
        %v709 = vadd.f32 %v672, %v703
        %v710 = vadd.f32 %v698, %v704
        %711 = vxpose.xlu0.b32.start [1/16] %v708, 128
        %712 = vxpose.xlu0.b32.cont [2/16] 0.0, 128
        %713 = vxpose.xlu0.b32.cont [3/16] 0.0, 128
        %714 = vxpose.xlu0.b32.cont [4/16] 0.0, 128
        %715 = vxpose.xlu0.b32.cont [5/16] 0.0, 128
        %716 = vxpose.xlu0.b32.cont [6/16] 0.0, 128
        %717 = vxpose.xlu0.b32.cont [7/16] 0.0, 128
        %718 = vxpose.xlu0.b32.cont [8/16] 0.0, 128
        %719 = vxpose.xlu0.b32.cont [9/16] 0.0, 128
        %720 = vxpose.xlu0.b32.cont [10/16] 0.0, 128
        %721 = vxpose.xlu0.b32.cont [11/16] 0.0, 128
        %722 = vxpose.xlu0.b32.cont [12/16] 0.0, 128
        %723 = vxpose.xlu0.b32.cont [13/16] 0.0, 128
        %724 = vxpose.xlu0.b32.cont [14/16] 0.0, 128
        %725 = vxpose.xlu0.b32.cont [15/16] 0.0, 128
        %726 = vxpose.xlu0.b32.end [16/16] 0.0, 128
        %v727 = vpop.trf.xlu0
        %v728 = vpop.trf.xlu0
        %v729 = vpop.trf.xlu0
        %v730 = vpop.trf.xlu0
        %v731 = vpop.trf.xlu0
        %v732 = vpop.trf.xlu0
        %v733 = vpop.trf.xlu0
        %v734 = vpop.trf.xlu0
        %v735 = vpop.trf.xlu0
        %v736 = vpop.trf.xlu0
        %v737 = vpop.trf.xlu0
        %v738 = vpop.trf.xlu0
        %v739 = vpop.trf.xlu0
        %v740 = vpop.trf.xlu0
        %v741 = vpop.trf.xlu0
        %v742 = vpop.trf.xlu0
        %vm743 = vcmask 64512
        %v745 = vsel %vm743, %v727, 0
        %v748 = vsel %vm743, %v728, 0
        %v751 = vsel %vm743, %v729, 0
        %v754 = vsel %vm743, %v730, 0
        %756 = vmatpush.msra.mxu0 0.0
        %757 = vmatpush.msra.mxu0 0.0
        %758 = vmatpush.msra.mxu0 0.0
        %759 = vmatpush.msra.mxu0 0.0
        %760 = vmatpush.msra.mxu0 0.0
        %761 = vmatpush.msra.mxu0 0.0
        %762 = vmatpush.msra.mxu0 0.0
        %763 = vmatpush.msra.mxu0 0.0
        %764 = vmatpush.msra.mxu0 0.0
        %765 = vmatpush.msra.mxu0 0.0
        %766 = vmatpush.msra.mxu0 0.0
        %767 = vmatpush.msra.mxu0 0.0
        %768 = vmatpush.msra.mxu0 0.0
        %769 = vmatpush.msra.mxu0 0.0
        %770 = vmatpush.msra.mxu0 0.0
        %771 = vmatpush.msra.mxu0 %v709
        %772 = vmatmul.f32.gmra.mxu0 %v745
        %v773 = vpop.f32.mrf.mxu0
        %v774 = vadd.f32 0.0, %v773
        %775 = vmatmul.f32.gmra.mxu0 %v748
        %v776 = vpop.f32.mrf.mxu0
        %v777 = vadd.f32 0.0, %v776
        %778 = vmatmul.f32.gmra.mxu0 %v751
        %v779 = vpop.f32.mrf.mxu0
        %v780 = vadd.f32 0.0, %v779
        %781 = vmatmul.f32.gmra.mxu0 %v754
        %v782 = vpop.f32.mrf.mxu0
        %v783 = vadd.f32 0.0, %v782
        %784 = vdwg.mxu0
        %v785 = vmul.f32 %v774, 0.17677669
        %v786 = vmul.f32 %v777, 0.17677669
        %v787 = vmul.f32 %v780, 0.17677669
        %v788 = vmul.f32 %v783, 0.17677669
        %vm789 = vcmask 261120
        %v790 = vsel %vm789, %v785, -inf
        %791 = vmax.xlane.f32.xlu0 %v790
        %v792 = vpop.xlane.xlu0 %791
        %v793 = vsel %vm789, %v786, -inf
        %794 = vmax.xlane.f32.xlu0 %v793
        %v795 = vpop.xlane.xlu0 %794
        %v796 = vsel %vm789, %v787, -inf
        %797 = vmax.xlane.f32.xlu0 %v796
        %v798 = vpop.xlane.xlu0 %797
        %v799 = vsel %vm789, %v788, -inf
        %800 = vmax.xlane.f32.xlu0 %v799
        %v801 = vpop.xlane.xlu0 %800
        %v802 = vsub.f32 %v785, %v792
        %v803 = vsub.f32 %v786, %v795
        %v804 = vsub.f32 %v787, %v798
        %v805 = vsub.f32 %v788, %v801
        %v806 = vmul.f32 %v802, 1.442695
        %v807 = vpow.pop %v806
        %v808 = vmul.f32 %v803, 1.442695
        %v809 = vpow.pop %v808
        %v810 = vmul.f32 %v804, 1.442695
        %v811 = vpow.pop %v810
        %v812 = vmul.f32 %v805, 1.442695
        %v813 = vpow.pop %v812
        %v814 = vsel %vm789, %v807, 0.0
        %815 = vadd.xlane.f32.xlu0 %v814
        %v816 = vpop.xlane.xlu0 %815
        %v817 = vsel %vm789, %v809, 0.0
        %818 = vadd.xlane.f32.xlu0 %v817
        %v819 = vpop.xlane.xlu0 %818
        %v820 = vsel %vm789, %v811, 0.0
        %821 = vadd.xlane.f32.xlu0 %v820
        %v822 = vpop.xlane.xlu0 %821
        %v823 = vsel %vm789, %v813, 0.0
        %824 = vadd.xlane.f32.xlu0 %v823
        %v825 = vpop.xlane.xlu0 %824
        %v826 = vrcp.pop %v816
        %v827 = vmul.f32 %v816, %v826
        %v828 = vsub.f32 1.0, %v827
        %v829 = vmul.f32 %v826, %v828
        %v830 = vadd.f32 %v826, %v829
        %vm831 = vweird.f32 %v816
        %vm832 = vweird.f32 %v826
        %vm833 = vmor %vm831, %vm832
        %v834 = vsel %vm833, %v826, %v830
        %v835 = vand.u32 2147483647, %v816
        %vm836 = vcmp.eq.f32.partialorder %v835, 8.507059e+37
        %v837 = vand.u32 %v816, 2147483648
        %v838 = vor.u32 1.1754944e-38, %v837
        %v839 = vsel %vm836, %v838, %v834
        %v840 = vmul.f32 %v807, %v839
        %v841 = vrcp.pop %v819
        %v842 = vmul.f32 %v819, %v841
        %v843 = vsub.f32 1.0, %v842
        %v844 = vmul.f32 %v841, %v843
        %v845 = vadd.f32 %v841, %v844
        %vm846 = vweird.f32 %v819
        %vm847 = vweird.f32 %v841
        %vm848 = vmor %vm846, %vm847
        %v849 = vsel %vm848, %v841, %v845
        %v850 = vand.u32 2147483647, %v819
        %vm851 = vcmp.eq.f32.partialorder %v850, 8.507059e+37
        %v852 = vand.u32 %v819, 2147483648
        %v853 = vor.u32 1.1754944e-38, %v852
        %v854 = vsel %vm851, %v853, %v849
        %v855 = vmul.f32 %v809, %v854
        %v856 = vrcp.pop %v822
        %v857 = vmul.f32 %v822, %v856
        %v858 = vsub.f32 1.0, %v857
        %v859 = vmul.f32 %v856, %v858
        %v860 = vadd.f32 %v856, %v859
        %vm861 = vweird.f32 %v822
        %vm862 = vweird.f32 %v856
        %vm863 = vmor %vm861, %vm862
        %v864 = vsel %vm863, %v856, %v860
        %v865 = vand.u32 2147483647, %v822
        %vm866 = vcmp.eq.f32.partialorder %v865, 8.507059e+37
        %v867 = vand.u32 %v822, 2147483648
        %v868 = vor.u32 1.1754944e-38, %v867
        %v869 = vsel %vm866, %v868, %v864
        %v870 = vmul.f32 %v811, %v869
        %v871 = vrcp.pop %v825
        %v872 = vmul.f32 %v825, %v871
        %v873 = vsub.f32 1.0, %v872
        %v874 = vmul.f32 %v871, %v873
        %v875 = vadd.f32 %v871, %v874
        %vm876 = vweird.f32 %v825
        %vm877 = vweird.f32 %v871
        %vm878 = vmor %vm876, %vm877
        %v879 = vsel %vm878, %v871, %v875
        %v880 = vand.u32 2147483647, %v825
        %vm881 = vcmp.eq.f32.partialorder %v880, 8.507059e+37
        %v882 = vand.u32 %v825, 2147483648
        %v883 = vor.u32 1.1754944e-38, %v882
        %v884 = vsel %vm881, %v883, %v879
        %v885 = vmul.f32 %v813, %v884
        %v887 = vsel %vm789, %v710, 0
        %v890 = vsel %vm789, %v840, 0
        %v893 = vsel %vm789, %v855, 0
        %v896 = vsel %vm789, %v870, 0
        %v899 = vsel %vm789, %v885, 0
        %901 = vmatpush.xpose.msra.mxu0 0.0
        %902 = vmatpush.xpose.msra.mxu0 0.0
        %903 = vmatpush.xpose.msra.mxu0 0.0
        %904 = vmatpush.xpose.msra.mxu0 0.0
        %905 = vmatpush.xpose.msra.mxu0 0.0
        %906 = vmatpush.xpose.msra.mxu0 0.0
        %907 = vmatpush.xpose.msra.mxu0 0.0
        %908 = vmatpush.xpose.msra.mxu0 0.0
        %909 = vmatpush.xpose.msra.mxu0 0.0
        %910 = vmatpush.xpose.msra.mxu0 0.0
        %911 = vmatpush.xpose.msra.mxu0 0.0
        %912 = vmatpush.xpose.msra.mxu0 0.0
        %913 = vmatpush.xpose.msra.mxu0 %v899
        %914 = vmatpush.xpose.msra.mxu0 %v896
        %915 = vmatpush.xpose.msra.mxu0 %v893
        %916 = vmatpush.xpose.msra.mxu0 %v890
        %917 = vmatmul.f32.gmra.mxu0 %v887
        %v918 = vpop.f32.mrf.mxu0
        %v919 = vadd.f32 0.0, %v918
        %920 = vdwg.mxu0
        %v921 = vpack.c.bf16 %v919, %v919
        %v922 = vld [vmem:[#allocation8] sm:$0xff]
        %v923 = vld [vmem:[#allocation8 + $0x8] sm:$0xff]
        %v924 = vld [vmem:[#allocation8 + $0x10] sm:$0xff]
        %v925 = vld [vmem:[#allocation8 + $0x18] sm:$0xff]
        %v926 = vld [vmem:[%s4] sm:$0x3]
        %v931 = vunpack.c.l.b16 %v922
        %v932 = vunpack.c.h.b16 %v922
        %v933 = vunpack.c.l.b16 %v923
        %v934 = vunpack.c.h.b16 %v923
        %v935 = vunpack.c.l.b16 %v924
        %v936 = vunpack.c.h.b16 %v924
        %v937 = vunpack.c.l.b16 %v925
        %v938 = vunpack.c.h.b16 %v925
        %v939 = vpack.c.b16 %v933, %v931
        %v940 = vpack.c.b16 %v934, %v932
        %v941 = vpack.c.b16 %v937, %v935
        %v942 = vpack.c.b16 %v938, %v936
        %v948 = vsel %vm789, %v921, 0
        %950 = vmatpush.bf16.msra.mxu0 0
        %951 = vmatpush.bf16.msra.mxu0 0
        %952 = vmatpush.bf16.msra.mxu0 0
        %953 = vmatpush.bf16.msra.mxu0 0
        %954 = vmatpush.bf16.msra.mxu0 0
        %955 = vmatpush.bf16.msra.mxu0 0
        %956 = vmatpush.bf16.msra.mxu0 %v941
        %957 = vmatpush.bf16.msra.mxu0 %v939
        %958 = vmatmul.bf16.gmra.mxu0 %v948
        %v959 = vpop.f32.mrf.mxu0
        %v960 = vadd.f32 0.0, %v959
        %v961 = vpop.f32.mrf.mxu0
        %962 = vdwg.mxu0
        %963 = vmatpush.bf16.msra.mxu0 0
        %964 = vmatpush.bf16.msra.mxu0 0
        %965 = vmatpush.bf16.msra.mxu0 0
        %966 = vmatpush.bf16.msra.mxu0 0
        %967 = vmatpush.bf16.msra.mxu0 0
        %968 = vmatpush.bf16.msra.mxu0 0
        %969 = vmatpush.bf16.msra.mxu0 %v942
        %970 = vmatpush.bf16.msra.mxu0 %v940
        %971 = vmatmul.bf16.gmra.mxu0 %v948
        %v972 = vpop.f32.mrf.mxu0
        %v973 = vadd.f32 0.0, %v972
        %v974 = vpop.f32.mrf.mxu0
        %975 = vdwg.mxu0
        %v977 = vperm.slane %v926, 0
        %v978 = vperm.slane %v926, 1
        %v981 = vadd.f32 %v960, %v977
        %v982 = vadd.f32 %v973, %v978
        %v983 = vpack.c.bf16 %v982, %v981
        %984 = vst [vmem:[%s290] sm:$0xff] %v983
        %s985 = sand.u32 %s142, 1
        %s986 = scalar_lea.sflag [#allocation4], %s985
        %s987 = sand.u32 %s142, 1
        %s988 = smul.addr %s987, 8
        %s989 = scalar_lea.vmem [#allocation10], %s988
        // Predicated region
        $region57: #{tpu_custom_call.1} parent=39 // pred_check
          %p990 = pneg %p152
        $region58: #{tpu_custom_call.1} parent=39 // pred_check_branch
          %992 = sbr.rel (%p990) target = $region60
        $region59: #{tpu_custom_call.1} parent=39 // pred_region
          %994 = vsyncadd %s986, 0
          %s995 = smul.addr %s24, 2
          %s996 = smul.addr %s995, 4
          %s997 = scalar_lea.hbm %s5, %s996
          %s999 = sshll.u32 %s989, 4
          %s1000 = int_to_ptr.vmem [resolvable:$true] %s999
          %s1001 = sshll.u32 %s997, 4
          %s1002 = int_to_ptr.hbm [resolvable:$true] %s1001
          %1004 = dma.vmem_to_hbm [thread:$0]  %s1000, 128, %s1002, %s986
        $region60: #{tpu_custom_call.1} parent=39 // pred_fallthru
          _
      $region40: #{tpu_custom_call.1} parent=5 // pred_fallthru
        _
      %p1005 = scmp.le.s32.totalorder 2, %s19
      // Predicated region
      $region61: #{tpu_custom_call.1} parent=5 // pred_check
        %p1006 = pneg %p1005
      $region62: #{tpu_custom_call.1} parent=5 // pred_check_branch
        %1008 = sbr.rel (%p1006) target = $region64
      $region63: #{tpu_custom_call.1} parent=5 // pred_region
        %s1009 = ssub.s32 %s19, 2
        // Predicated region
        $region65: #{tpu_custom_call.1} parent=63 // pred_check
          %p1010 = pneg %p158
        $region66: #{tpu_custom_call.1} parent=63 // pred_check_branch
          %1012 = sbr.rel (%p1010) target = $region68
        $region67: #{tpu_custom_call.1} parent=63 // pred_region
          %s1013 = sand.u32 %s143, 1
          %s1014 = scalar_lea.sflag [#allocation4], %s1013
          %s1015 = sand.u32 %s143, 1
          %s1016 = smul.addr %s1015, 8
          %s1017 = scalar_lea.vmem [#allocation10], %s1016
          %1019 = dma.done %s1014, 128
        $region68: #{tpu_custom_call.1} parent=63 // pred_fallthru
          _
      $region64: #{tpu_custom_call.1} parent=5 // pred_fallthru
        _
    $region6: #{tpu_custom_call.1} parent=1 // loop_footer
      %s23 = sadd.s32 1, %s19
    $region7: #{tpu_custom_call.1} parent=1 // loop_footer_branch
      %18 = sbr.rel target = $region3
    $region8: #{tpu_custom_call.1} parent=1 // loop_exit
      _
    %1020 = vsyncpa [#allocation3], 1
    %s1021 = scalar_lea.sflag [#allocation3], 1
    %1022 = vsyncpa %s1021, 1
    %1023 = vsyncpa [#allocation6], 1
    %1024 = vsyncpa [#allocation9], 1
    %1025 = vsyncpa [#allocation4], 1
    %s1026 = scalar_lea.sflag [#allocation4], 1
    %1027 = vsyncpa %s1026, 1

</llo_original>
